<compile_context>
chip_gen: v7x
topology: tpu7x:2x2x1
jax: 0.10.0
libtpu: 0.0.40
codegen_flags: <defaults>
</compile_context>

<pallas_src>
import jax
import jax.numpy as jnp
from jax.experimental import pallas as pl
from jax.experimental.pallas import tpu as pltpu

H = W = 14
HW = H * W              # 196
C_ENC = 384             # channels out of DenseNet-161 transition2
C_CHUNK = 64            # channel chunk for the sublane add-tree (384 = 6 * 64)
_LANES = 128


def _stable_sigmoid(v):
    # sigma(v) = 1/(1+exp(-v)) without exp overflow for large |v|.
    # exp runs on the EUP slot; the exact divide is negligible (kernel is
    # HBM-bound), so no approximate reciprocal is needed.
    e = jnp.exp(-jnp.abs(v))            # in (0, 1]
    r = 1.0 / (1.0 + e)                 # sigma(|v|)
    return jnp.where(v >= 0.0, r, e * r)


def pixelwise_kernel(x_ref, wdec_ref, bdec_ref, wlin_ref, blin_ref,
                     omap_ref, out_ref):
    # x_ref:    (TB, C, HW) f32  VMEM  encoder features (NCHW flattened: C on
    #                                  sublanes, pixels on lanes), streamed.
    # wdec_ref: (C, 1)      f32  VMEM  1x1-conv weight (out_channels=1), resident
    # bdec_ref: (1,)        f32  SMEM  conv bias
    # wlin_ref: (1, HW)     f32  VMEM  Linear(196, 1) weight row, resident
    # blin_ref: (1,)        f32  SMEM  linear bias
    # omap_ref: (TB, HW)    f32  VMEM  sigmoid(1x1 conv) -> (B,1,14,14) outside
    # out_ref:  (TB, 1)     f32  VMEM  final per-sample sigmoid scalar
    tb = x_ref.shape[0]

    # 1x1 conv == per-pixel dot over channels.  Channels live on the sublane
    # axis, so this is a VPU multiply + sublane add-tree; chunking over C keeps
    # every intermediate at (TB, C_CHUNK, HW) instead of the full block.
    dec = jnp.zeros((tb, HW), dtype=jnp.float32)
    for c in range(C_ENC // C_CHUNK):
        lo, hi = c * C_CHUNK, (c + 1) * C_CHUNK
        xc = x_ref[:, lo:hi, :]                          # (TB, 64, HW) f32
        wc = wdec_ref[lo:hi, :]                          # (64, 1)      f32
        dec = dec + jnp.sum(xc * wc[None, :, :], axis=1)
    dec = dec + bdec_ref[0]

    omap = _stable_sigmoid(dec)                          # (TB, HW)
    omap_ref[...] = omap

    # TODO(synk): nn.Dropout(0.3) is stochastic in train mode; eval-mode
    # (identity) semantics are used here.
    # Linear(196 -> 1): lane multiply + cross-lane reduce (keeps the MXU idle).
    out = jnp.sum(omap * wlin_ref[...], axis=-1, keepdims=True)   # (TB, 1)
    out_ref[...] = _stable_sigmoid(out + blin_ref[0])


def _pick_tb(batch, max_tb):
    """Largest multiple-of-8 divisor of `batch` that is <= max_tb (TPU output
    blocks want the second-to-last dim to be a multiple of 8 or the full
    extent).  Falls back to a single full-batch block.  Prefers >=2 grid steps
    so the "parallel" batch axis can shard across TensorCores (v7x megacore)."""
    best = 0
    t = 8
    while t <= min(max_tb, batch):
        if batch % t == 0:
            best = t
        t += 8
    if best == 0:
        return batch                     # single full block; always layout-legal
    if batch // best < 2:
        for t in range(best - 8, 7, -8):
            if batch % t == 0 and batch // t >= 2:
                return t
    return best


def pixelwise_forward(enc_feat, w_dec, b_dec, w_lin, b_lin, *, max_tb=32):
    """enc_feat: (B, 384, 14, 14) NCHW encoder output (DenseNet-161 features[:8]).

    Returns (out_map: (B,1,14,14) f32, out: (B,) f32) matching the PyTorch module.
    """
    B = enc_feat.shape[0]

    # Free NCHW -> (B, C, HW) view; no dtype cast, no transpose pre-pass.
    x = enc_feat.astype(jnp.float32).reshape(B, C_ENC, HW)

    tb = _pick_tb(B, max_tb)
    grid = (B // tb,)

    wdec_k = w_dec.reshape(C_ENC, 1).astype(jnp.float32)   # (1,384,1,1) -> (384,1)
    bdec_k = b_dec.reshape(1).astype(jnp.float32)
    wlin_k = w_lin.reshape(1, HW).astype(jnp.float32)      # (1,196) row
    blin_k = b_lin.reshape(1).astype(jnp.float32)

    # Double-buffered, lane-padded feature block + headroom for weights/outputs
    # and chunk intermediates.  Explicit because v5e's default scoped-VMEM limit
    # (16 MiB) is too small for TB=32; capped at 40 MiB to stay safe on v7x
    # (64 MiB physical VMEM per TensorCore).
    hw_pad = pl.cdiv(HW, _LANES) * _LANES                  # 196 -> 256 lanes
    block_bytes = tb * C_ENC * hw_pad * 4
    vmem_limit = int(min(max(2 * block_bytes + (8 << 20), 16 << 20), 40 << 20))

    omap_flat, out = pl.pallas_call(
        pixelwise_kernel,
        out_shape=(
            jax.ShapeDtypeStruct((B, HW), jnp.float32),
            jax.ShapeDtypeStruct((B, 1), jnp.float32),
        ),
        grid=grid,
        in_specs=[
            pl.BlockSpec((tb, C_ENC, HW), lambda b: (b, 0, 0)),   # streamed features
            pl.BlockSpec((C_ENC, 1), lambda b: (0, 0)),           # resident conv weight
            pl.BlockSpec(memory_space=pltpu.MemorySpace.SMEM),    # conv bias
            pl.BlockSpec((1, HW), lambda b: (0, 0)),              # resident linear weight
            pl.BlockSpec(memory_space=pltpu.MemorySpace.SMEM),    # linear bias
        ],
        out_specs=(
            pl.BlockSpec((tb, HW), lambda b: (b, 0)),
            pl.BlockSpec((tb, 1), lambda b: (b, 0)),
        ),
        compiler_params=pltpu.CompilerParams(
            dimension_semantics=("parallel",),
            vmem_limit_bytes=vmem_limit,
        ),
    )(x, wdec_k, bdec_k, wlin_k, blin_k)

    out_map = omap_flat.reshape(B, 1, H, W)      # torch.sigmoid(dec), NCHW
    return out_map, out[:, 0]                    # torch.flatten(out) -> (B,)


def reference_forward(enc_feat, w_dec, b_dec, w_lin, b_lin):
    """Pure-JAX f32 reference of the same (post-encoder) forward pass."""
    B = enc_feat.shape[0]
    dec = jnp.einsum("bchw,c->bhw", enc_feat.astype(jnp.float32),
                     w_dec.reshape(C_ENC)) + b_dec[0]
    out_map = jax.nn.sigmoid(dec)[:, None, :, :]             # (B,1,14,14)
    flat = out_map.reshape(B, HW)                             # == .view(-1, 196)
    out = jax.nn.sigmoid(flat @ w_lin.reshape(1, HW).T + b_lin)
    return out_map, out.reshape(-1)


if __name__ == "__main__":
    key = jax.random.PRNGKey(0)
    k_x, k_wd, k_bd, k_wl, k_bl = jax.random.split(key, 5)

    B = 2
    # Encoder output of DenseNet-161 features[:8] for a 224x224 input:
    enc_feat = jax.random.normal(k_x, (B, C_ENC, H, W), dtype=jnp.float32)

    # Deterministic parameter init (shapes match the PyTorch module):
    #   dec:    Conv2d(384, 1, kernel_size=1) -> weight (1,384,1,1), bias (1,)
    #   linear: Linear(196, 1)                -> weight (1,196),    bias (1,)
    w_dec = jax.random.uniform(k_wd, (1, C_ENC, 1, 1), jnp.float32,
                               minval=-1.0, maxval=1.0) / jnp.sqrt(C_ENC)
    b_dec = jax.random.uniform(k_bd, (1,), jnp.float32,
                               minval=-1.0, maxval=1.0) / jnp.sqrt(C_ENC)
    w_lin = jax.random.uniform(k_wl, (1, HW), jnp.float32,
                               minval=-1.0, maxval=1.0) / jnp.sqrt(HW)
    b_lin = jax.random.uniform(k_bl, (1,), jnp.float32,
                               minval=-1.0, maxval=1.0) / jnp.sqrt(HW)

    out_map, out = pixelwise_forward(enc_feat, w_dec, b_dec, w_lin, b_lin)
    jax.block_until_ready((out_map, out))

    ref_map, ref_out = reference_forward(enc_feat, w_dec, b_dec, w_lin, b_lin)
    assert out_map.shape == (B, 1, H, W) and out.shape == (B,)
    # Everything is f32 end-to-end now (no bf16 stream, no approx reciprocal),
    # so only summation-order rounding separates kernel and reference.
    assert jnp.allclose(out_map, ref_map, atol=1e-3, rtol=0.0)
    assert jnp.allclose(out, ref_out, atol=1e-3, rtol=0.0)

    print("KERNEL_OK")
</pallas_src>

<mosaic_0001>
module attributes {stable_mosaic.version = 11 : i64} {
  func.func @pixelwise_kernel(%arg0: i32, %arg1: memref<2x384x196xf32, #tpu.memory_space<vmem>>, %arg2: memref<384x1xf32, #tpu.memory_space<vmem>>, %arg3: memref<1xf32, #tpu.memory_space<smem>>, %arg4: memref<1x196xf32, #tpu.memory_space<vmem>>, %arg5: memref<1xf32, #tpu.memory_space<smem>>, %arg6: memref<2x196xf32, #tpu.memory_space<vmem>>, %arg7: memref<2x1xf32, #tpu.memory_space<vmem>>) attributes {dimension_semantics = [#tpu.dimension_semantics<parallel>], iteration_bounds = array<i64: 1>, scalar_prefetch = 0 : i64, scratch_operands = 0 : i64, tpu.core_type = #tpu.core_type<tc>, window_params = [{transform_indices = @transform_0, window_bounds = array<i64: 2, 384, 196>}, {pipeline_mode = #tpu.pipeline_mode<synchronous>, transform_indices = @transform_1, window_bounds = array<i64: 384, 1>}, {transform_indices = @transform_2, window_bounds = array<i64: 1>}, {pipeline_mode = #tpu.pipeline_mode<synchronous>, transform_indices = @transform_3, window_bounds = array<i64: 1, 196>}, {transform_indices = @transform_4, window_bounds = array<i64: 1>}, {transform_indices = @transform_5, window_bounds = array<i64: 2, 196>}, {transform_indices = @transform_6, window_bounds = array<i64: 2, 1>}]} {
    %cst = arith.constant 0.000000e+00 : f32
    %0 = vector.broadcast %cst : f32 to vector<2x196xf32>
    %c0 = arith.constant 0 : index
    %c0_0 = arith.constant 0 : index
    %c0_1 = arith.constant 0 : index
    %1 = vector.load %arg1[%c0, %c0_0, %c0_1] : memref<2x384x196xf32, #tpu.memory_space<vmem>>, vector<2x64x196xf32>
    %c0_2 = arith.constant 0 : index
    %c0_3 = arith.constant 0 : index
    %2 = vector.load %arg2[%c0_2, %c0_3] : memref<384x1xf32, #tpu.memory_space<vmem>>, vector<64x1xf32>
    %3 = vector.shape_cast %2 : vector<64x1xf32> to vector<1x64x1xf32>
    %4 = vector.broadcast %3 : vector<1x64x1xf32> to vector<2x64x196xf32>
    %5 = arith.mulf %1, %4 : vector<2x64x196xf32>
    %cst_4 = arith.constant dense<0.000000e+00> : vector<2x196xf32>
    %6 = vector.multi_reduction <add>, %5, %cst_4 [1] : vector<2x64x196xf32> to vector<2x196xf32>
    %7 = arith.addf %0, %6 : vector<2x196xf32>
    %c0_5 = arith.constant 0 : index
    %c64 = arith.constant 64 : index
    %c0_6 = arith.constant 0 : index
    %8 = vector.load %arg1[%c0_5, %c64, %c0_6] : memref<2x384x196xf32, #tpu.memory_space<vmem>>, vector<2x64x196xf32>
    %c64_7 = arith.constant 64 : index
    %c0_8 = arith.constant 0 : index
    %9 = vector.load %arg2[%c64_7, %c0_8] : memref<384x1xf32, #tpu.memory_space<vmem>>, vector<64x1xf32>
    %10 = vector.shape_cast %9 : vector<64x1xf32> to vector<1x64x1xf32>
    %11 = vector.broadcast %10 : vector<1x64x1xf32> to vector<2x64x196xf32>
    %12 = arith.mulf %8, %11 : vector<2x64x196xf32>
    %cst_9 = arith.constant dense<0.000000e+00> : vector<2x196xf32>
    %13 = vector.multi_reduction <add>, %12, %cst_9 [1] : vector<2x64x196xf32> to vector<2x196xf32>
    %14 = arith.addf %7, %13 : vector<2x196xf32>
    %c0_10 = arith.constant 0 : index
    %c128 = arith.constant 128 : index
    %c0_11 = arith.constant 0 : index
    %15 = vector.load %arg1[%c0_10, %c128, %c0_11] : memref<2x384x196xf32, #tpu.memory_space<vmem>>, vector<2x64x196xf32>
    %c128_12 = arith.constant 128 : index
    %c0_13 = arith.constant 0 : index
    %16 = vector.load %arg2[%c128_12, %c0_13] : memref<384x1xf32, #tpu.memory_space<vmem>>, vector<64x1xf32>
    %17 = vector.shape_cast %16 : vector<64x1xf32> to vector<1x64x1xf32>
    %18 = vector.broadcast %17 : vector<1x64x1xf32> to vector<2x64x196xf32>
    %19 = arith.mulf %15, %18 : vector<2x64x196xf32>
    %cst_14 = arith.constant dense<0.000000e+00> : vector<2x196xf32>
    %20 = vector.multi_reduction <add>, %19, %cst_14 [1] : vector<2x64x196xf32> to vector<2x196xf32>
    %21 = arith.addf %14, %20 : vector<2x196xf32>
    %c0_15 = arith.constant 0 : index
    %c192 = arith.constant 192 : index
    %c0_16 = arith.constant 0 : index
    %22 = vector.load %arg1[%c0_15, %c192, %c0_16] : memref<2x384x196xf32, #tpu.memory_space<vmem>>, vector<2x64x196xf32>
    %c192_17 = arith.constant 192 : index
    %c0_18 = arith.constant 0 : index
    %23 = vector.load %arg2[%c192_17, %c0_18] : memref<384x1xf32, #tpu.memory_space<vmem>>, vector<64x1xf32>
    %24 = vector.shape_cast %23 : vector<64x1xf32> to vector<1x64x1xf32>
    %25 = vector.broadcast %24 : vector<1x64x1xf32> to vector<2x64x196xf32>
    %26 = arith.mulf %22, %25 : vector<2x64x196xf32>
    %cst_19 = arith.constant dense<0.000000e+00> : vector<2x196xf32>
    %27 = vector.multi_reduction <add>, %26, %cst_19 [1] : vector<2x64x196xf32> to vector<2x196xf32>
    %28 = arith.addf %21, %27 : vector<2x196xf32>
    %c0_20 = arith.constant 0 : index
    %c256 = arith.constant 256 : index
    %c0_21 = arith.constant 0 : index
    %29 = vector.load %arg1[%c0_20, %c256, %c0_21] : memref<2x384x196xf32, #tpu.memory_space<vmem>>, vector<2x64x196xf32>
    %c256_22 = arith.constant 256 : index
    %c0_23 = arith.constant 0 : index
    %30 = vector.load %arg2[%c256_22, %c0_23] : memref<384x1xf32, #tpu.memory_space<vmem>>, vector<64x1xf32>
    %31 = vector.shape_cast %30 : vector<64x1xf32> to vector<1x64x1xf32>
    %32 = vector.broadcast %31 : vector<1x64x1xf32> to vector<2x64x196xf32>
    %33 = arith.mulf %29, %32 : vector<2x64x196xf32>
    %cst_24 = arith.constant dense<0.000000e+00> : vector<2x196xf32>
    %34 = vector.multi_reduction <add>, %33, %cst_24 [1] : vector<2x64x196xf32> to vector<2x196xf32>
    %35 = arith.addf %28, %34 : vector<2x196xf32>
    %c0_25 = arith.constant 0 : index
    %c320 = arith.constant 320 : index
    %c0_26 = arith.constant 0 : index
    %36 = vector.load %arg1[%c0_25, %c320, %c0_26] : memref<2x384x196xf32, #tpu.memory_space<vmem>>, vector<2x64x196xf32>
    %c320_27 = arith.constant 320 : index
    %c0_28 = arith.constant 0 : index
    %37 = vector.load %arg2[%c320_27, %c0_28] : memref<384x1xf32, #tpu.memory_space<vmem>>, vector<64x1xf32>
    %38 = vector.shape_cast %37 : vector<64x1xf32> to vector<1x64x1xf32>
    %39 = vector.broadcast %38 : vector<1x64x1xf32> to vector<2x64x196xf32>
    %40 = arith.mulf %36, %39 : vector<2x64x196xf32>
    %cst_29 = arith.constant dense<0.000000e+00> : vector<2x196xf32>
    %41 = vector.multi_reduction <add>, %40, %cst_29 [1] : vector<2x64x196xf32> to vector<2x196xf32>
    %42 = arith.addf %35, %41 : vector<2x196xf32>
    %c0_30 = arith.constant 0 : index
    %43 = memref.load %arg3[%c0_30] : memref<1xf32, #tpu.memory_space<smem>>
    %44 = vector.broadcast %43 : f32 to vector<2x196xf32>
    %45 = arith.addf %42, %44 : vector<2x196xf32>
    %46 = math.absf %45 : vector<2x196xf32>
    %cst_31 = arith.constant 0.000000e+00 : f32
    %47 = vector.broadcast %cst_31 : f32 to vector<2x196xf32>
    %48 = arith.subf %47, %46 : vector<2x196xf32>
    %49 = math.exp %48 : vector<2x196xf32>
    %cst_32 = arith.constant 1.000000e+00 : f32
    %50 = vector.broadcast %cst_32 : f32 to vector<2x196xf32>
    %51 = arith.addf %50, %49 : vector<2x196xf32>
    %cst_33 = arith.constant 1.000000e+00 : f32
    %52 = vector.broadcast %cst_33 : f32 to vector<2x196xf32>
    %53 = arith.divf %52, %51 : vector<2x196xf32>
    %cst_34 = arith.constant 0.000000e+00 : f32
    %54 = vector.broadcast %cst_34 : f32 to vector<2x196xf32>
    %55 = arith.cmpf oge, %45, %54 : vector<2x196xf32>
    %56 = arith.mulf %49, %53 : vector<2x196xf32>
    %57 = arith.select %55, %53, %56 : vector<2x196xi1>, vector<2x196xf32>
    %c0_35 = arith.constant 0 : index
    %c0_36 = arith.constant 0 : index
    %58 = vector.load %arg6[%c0_35, %c0_36] : memref<2x196xf32, #tpu.memory_space<vmem>>, vector<2x196xf32>
    tpu.vector_store %arg6[%c0_35, %c0_36], %57 {strides = array<i32>} : memref<2x196xf32, #tpu.memory_space<vmem>>, vector<2x196xf32>,
    %c0_37 = arith.constant 0 : index
    %c0_38 = arith.constant 0 : index
    %59 = vector.load %arg4[%c0_37, %c0_38] : memref<1x196xf32, #tpu.memory_space<vmem>>, vector<1x196xf32>
    %60 = vector.broadcast %59 : vector<1x196xf32> to vector<2x196xf32>
    %61 = arith.mulf %57, %60 : vector<2x196xf32>
    %cst_39 = arith.constant dense<0.000000e+00> : vector<2xf32>
    %62 = vector.multi_reduction <add>, %61, %cst_39 [1] : vector<2x196xf32> to vector<2xf32>
    %63 = vector.shape_cast %62 : vector<2xf32> to vector<2x1xf32>
    %c0_40 = arith.constant 0 : index
    %64 = memref.load %arg5[%c0_40] : memref<1xf32, #tpu.memory_space<smem>>
    %65 = vector.broadcast %64 : f32 to vector<2x1xf32>
    %66 = arith.addf %63, %65 : vector<2x1xf32>
    %67 = math.absf %66 : vector<2x1xf32>
    %cst_41 = arith.constant 0.000000e+00 : f32
    %68 = vector.broadcast %cst_41 : f32 to vector<2x1xf32>
    %69 = arith.subf %68, %67 : vector<2x1xf32>
    %70 = math.exp %69 : vector<2x1xf32>
    %cst_42 = arith.constant 1.000000e+00 : f32
    %71 = vector.broadcast %cst_42 : f32 to vector<2x1xf32>
    %72 = arith.addf %71, %70 : vector<2x1xf32>
    %cst_43 = arith.constant 1.000000e+00 : f32
    %73 = vector.broadcast %cst_43 : f32 to vector<2x1xf32>
    %74 = arith.divf %73, %72 : vector<2x1xf32>
    %cst_44 = arith.constant 0.000000e+00 : f32
    %75 = vector.broadcast %cst_44 : f32 to vector<2x1xf32>
    %76 = arith.cmpf oge, %66, %75 : vector<2x1xf32>
    %77 = arith.mulf %70, %74 : vector<2x1xf32>
    %78 = arith.select %76, %74, %77 : vector<2x1xi1>, vector<2x1xf32>
    %c0_45 = arith.constant 0 : index
    %c0_46 = arith.constant 0 : index
    %79 = vector.load %arg7[%c0_45, %c0_46] : memref<2x1xf32, #tpu.memory_space<vmem>>, vector<2x1xf32>
    tpu.vector_store %arg7[%c0_45, %c0_46], %78 {strides = array<i32>} : memref<2x1xf32, #tpu.memory_space<vmem>>, vector<2x1xf32>,
    return
  }
  func.func @transform_0(%arg0: i32) -> (i32, i32, i32) {
    %c0_i32 = arith.constant 0 : i32
    %c0_i32_0 = arith.constant 0 : i32
    %c0_i32_1 = arith.constant 0 : i32
    return %arg0, %c0_i32, %c0_i32_0 : i32, i32, i32
  }
  func.func @transform_1(%arg0: i32) -> (i32, i32) {
    %c0_i32 = arith.constant 0 : i32
    %c0_i32_0 = arith.constant 0 : i32
    %c0_i32_1 = arith.constant 0 : i32
    return %c0_i32, %c0_i32_0 : i32, i32
  }
  func.func @transform_2(%arg0: i32) -> i32 {
    %c0_i32 = arith.constant 0 : i32
    %c0_i32_0 = arith.constant 0 : i32
    return %c0_i32 : i32
  }
  func.func @transform_3(%arg0: i32) -> (i32, i32) {
    %c0_i32 = arith.constant 0 : i32
    %c0_i32_0 = arith.constant 0 : i32
    %c0_i32_1 = arith.constant 0 : i32
    return %c0_i32, %c0_i32_0 : i32, i32
  }
  func.func @transform_4(%arg0: i32) -> i32 {
    %c0_i32 = arith.constant 0 : i32
    %c0_i32_0 = arith.constant 0 : i32
    return %c0_i32 : i32
  }
  func.func @transform_5(%arg0: i32) -> (i32, i32) {
    %c0_i32 = arith.constant 0 : i32
    %c0_i32_0 = arith.constant 0 : i32
    return %arg0, %c0_i32 : i32, i32
  }
  func.func @transform_6(%arg0: i32) -> (i32, i32) {
    %c0_i32 = arith.constant 0 : i32
    %c0_i32_0 = arith.constant 0 : i32
    return %arg0, %c0_i32 : i32, i32
  }
}

</mosaic_0001>

<llo_original>
// kernel: tpu_custom_call.1
$region0: #{tpu_custom_call.1}
  #allocation0 [shape = 'u32[]', space=smem, size = 0x4, offset = 0x4, fixed_abs, tag = 'smem constant byte address 0x4 - core index']
  #allocation1 [shape = 'u32[144,128]{1,0:T(1,128)}', space=vmem, size = 0x12000, scoped, tag = 'internal scratch']
  #allocation2 [shape = 'f32[1]{0:T(128)S(6)}', space=smem, size = 0x200, scoped, tag = 'scoped memory for tpu_custom_call.1']
  #allocation3 [shape = 'f32[1]{0:T(128)S(6)}', space=smem, size = 0x200, scoped, tag = 'scoped memory for tpu_custom_call.1']
  %s0 = inlined_call_operand.vmem [shape: f32[2,384,196], index: 0, kind: input, shape index: {}]
  %s1 = inlined_call_operand.vmem [shape: f32[384,1], index: 1, kind: input, shape index: {}]
  %s2 = inlined_call_operand.<no memory space> [shape: f32[1], index: 2, kind: input, shape index: {}]
  %s3 = inlined_call_operand.vmem [shape: f32[1,196], index: 3, kind: input, shape index: {}]
  %s4 = inlined_call_operand.<no memory space> [shape: f32[1], index: 4, kind: input, shape index: {}]
  %s5 = inlined_call_operand.hbm [shape: f32[2,196], index: 5, kind: output, shape index: {0}]
  %s6 = inlined_call_operand.vmem [shape: f32[2,1], index: 6, kind: output, shape index: {1}]
  %7 = xla_tuple %s5, %s6
  %s8 = sld [smem:[#allocation0]]
  $region38: #{tpu_custom_call.1} parent=0
    _
  %s10 = ssub.s32 1, %s8
  %s11 = scalar_select 0, %s10, %s8
  %12 = sst [smem:[#allocation2]] %s2
  %13 = sst [smem:[#allocation3]] %s4
  $region1: #{tpu_custom_call.1} parent=0
    #allocation4 [shape = 'u8[2048]{0}', space=vmem, size = 0x800, scoped, tag = 'output window, operand 0, single buffered']
    #allocation5 [shape = 's32[1]{0}', space=sflag, size = 0x4, scoped, tag = 'scoped memory for tpu_custom_call.1']
    %14 = vsyncpa [#allocation5], 0
    // Predicated region
    $region2: #{tpu_custom_call.1} parent=1 // pred_check
      _
    $region3: #{tpu_custom_call.1} parent=1 // pred_check_branch
      %16 = sbr.rel (0) target = $region5
    $region4: #{tpu_custom_call.1} parent=1 // pred_region
      _
    $region5: #{tpu_custom_call.1} parent=1 // pred_fallthru
      _
    // Predicated region
    $region6: #{tpu_custom_call.1} parent=1 // pred_check
      _
    $region7: #{tpu_custom_call.1} parent=1 // pred_check_branch
      %18 = sbr.rel (0) target = $region9
    $region8: #{tpu_custom_call.1} parent=1 // pred_region
      _
    $region9: #{tpu_custom_call.1} parent=1 // pred_fallthru
      _
    // Predicated region
    $region10: #{tpu_custom_call.1} parent=1 // pred_check
      _
    $region11: #{tpu_custom_call.1} parent=1 // pred_check_branch
      %20 = sbr.rel (0) target = $region13
    $region12: #{tpu_custom_call.1} parent=1 // pred_region
      _
    $region13: #{tpu_custom_call.1} parent=1 // pred_fallthru
      _
    // Predicated region
    $region14: #{tpu_custom_call.1} parent=1 // pred_check
      _
    $region15: #{tpu_custom_call.1} parent=1 // pred_check_branch
      %22 = sbr.rel (0) target = $region17
    $region16: #{tpu_custom_call.1} parent=1 // pred_region
      _
    $region17: #{tpu_custom_call.1} parent=1 // pred_fallthru
      _
    // Predicated region
    $region18: #{tpu_custom_call.1} parent=1 // pred_check
      _
    $region19: #{tpu_custom_call.1} parent=1 // pred_check_branch
      %24 = sbr.rel (0) target = $region21
    $region20: #{tpu_custom_call.1} parent=1 // pred_region
      _
    $region21: #{tpu_custom_call.1} parent=1 // pred_fallthru
      _
    %v25 = vld [vmem:[%s0] sm:$0xff]
    %v26 = vld [vmem:[%s0 + $0x8] sm:$0xff]
    %v27 = vld [vmem:[%s0 + $0x10] sm:$0xff]
    %v28 = vld [vmem:[%s0 + $0x18] sm:$0xff]
    %v29 = vld [vmem:[%s0 + $0x20] sm:$0xff]
    %v30 = vld [vmem:[%s0 + $0x28] sm:$0xff]
    %v31 = vld [vmem:[%s0 + $0x30] sm:$0xff]
    %v32 = vld [vmem:[%s0 + $0x38] sm:$0xff]
    %v33 = vld [vmem:[%s0 + $0x40] sm:$0xff]
    %v34 = vld [vmem:[%s0 + $0x48] sm:$0xff]
    %v35 = vld [vmem:[%s0 + $0x50] sm:$0xff]
    %v36 = vld [vmem:[%s0 + $0x58] sm:$0xff]
    %v37 = vld [vmem:[%s0 + $0x60] sm:$0xff]
    %v38 = vld [vmem:[%s0 + $0x68] sm:$0xff]
    %v39 = vld [vmem:[%s0 + $0x70] sm:$0xff]
    %v40 = vld [vmem:[%s0 + $0x78] sm:$0xff]
    %v41 = vld [vmem:[%s0 + $0x300] sm:$0xff]
    %v42 = vld [vmem:[%s0 + $0x308] sm:$0xff]
    %v43 = vld [vmem:[%s0 + $0x310] sm:$0xff]
    %v44 = vld [vmem:[%s0 + $0x318] sm:$0xff]
    %v45 = vld [vmem:[%s0 + $0x320] sm:$0xff]
    %v46 = vld [vmem:[%s0 + $0x328] sm:$0xff]
    %v47 = vld [vmem:[%s0 + $0x330] sm:$0xff]
    %v48 = vld [vmem:[%s0 + $0x338] sm:$0xff]
    %v49 = vld [vmem:[%s0 + $0x340] sm:$0xff]
    %v50 = vld [vmem:[%s0 + $0x348] sm:$0xff]
    %v51 = vld [vmem:[%s0 + $0x350] sm:$0xff]
    %v52 = vld [vmem:[%s0 + $0x358] sm:$0xff]
    %v53 = vld [vmem:[%s0 + $0x360] sm:$0xff]
    %v54 = vld [vmem:[%s0 + $0x368] sm:$0xff]
    %v55 = vld [vmem:[%s0 + $0x370] sm:$0xff]
    %v56 = vld [vmem:[%s0 + $0x378] sm:$0xff]
    %v57 = vld [vmem:[%s1] sm:$0xff]
    %v58 = vld [vmem:[%s1 + $0x8] sm:$0xff]
    %v59 = vld [vmem:[%s1 + $0x10] sm:$0xff]
    %v60 = vld [vmem:[%s1 + $0x18] sm:$0xff]
    %v61 = vld [vmem:[%s1 + $0x20] sm:$0xff]
    %v62 = vld [vmem:[%s1 + $0x28] sm:$0xff]
    %v63 = vld [vmem:[%s1 + $0x30] sm:$0xff]
    %v64 = vld [vmem:[%s1 + $0x38] sm:$0xff]
    %66 = vset.pattern.permute.xlu0 0
    %67 = vperm.xlu0 %66, %v57
    %v68 = vpop.permute.xlu0 %67
    %71 = vset.pattern.permute.xlu0 0
    %72 = vperm.xlu0 %71, %v58
    %v73 = vpop.permute.xlu0 %72
    %76 = vset.pattern.permute.xlu0 0
    %77 = vperm.xlu0 %76, %v59
    %v78 = vpop.permute.xlu0 %77
    %81 = vset.pattern.permute.xlu0 0
    %82 = vperm.xlu0 %81, %v60
    %v83 = vpop.permute.xlu0 %82
    %86 = vset.pattern.permute.xlu0 0
    %87 = vperm.xlu0 %86, %v61
    %v88 = vpop.permute.xlu0 %87
    %91 = vset.pattern.permute.xlu0 0
    %92 = vperm.xlu0 %91, %v62
    %v93 = vpop.permute.xlu0 %92
    %96 = vset.pattern.permute.xlu0 0
    %97 = vperm.xlu0 %96, %v63
    %v98 = vpop.permute.xlu0 %97
    %101 = vset.pattern.permute.xlu0 0
    %102 = vperm.xlu0 %101, %v64
    %v103 = vpop.permute.xlu0 %102
    %v105 = vmul.f32 %v25, %v68
    %v106 = vmul.f32 %v26, %v68
    %v107 = vmul.f32 %v27, %v73
    %v108 = vmul.f32 %v28, %v73
    %v109 = vmul.f32 %v29, %v78
    %v110 = vmul.f32 %v30, %v78
    %v111 = vmul.f32 %v31, %v83
    %v112 = vmul.f32 %v32, %v83
    %v113 = vmul.f32 %v33, %v88
    %v114 = vmul.f32 %v34, %v88
    %v115 = vmul.f32 %v35, %v93
    %v116 = vmul.f32 %v36, %v93
    %v117 = vmul.f32 %v37, %v98
    %v118 = vmul.f32 %v38, %v98
    %v119 = vmul.f32 %v39, %v103
    %v120 = vmul.f32 %v40, %v103
    %v121 = vmul.f32 %v41, %v68
    %v122 = vmul.f32 %v42, %v68
    %v123 = vmul.f32 %v43, %v73
    %v124 = vmul.f32 %v44, %v73
    %v125 = vmul.f32 %v45, %v78
    %v126 = vmul.f32 %v46, %v78
    %v127 = vmul.f32 %v47, %v83
    %v128 = vmul.f32 %v48, %v83
    %v129 = vmul.f32 %v49, %v88
    %v130 = vmul.f32 %v50, %v88
    %v131 = vmul.f32 %v51, %v93
    %v132 = vmul.f32 %v52, %v93
    %v133 = vmul.f32 %v53, %v98
    %v134 = vmul.f32 %v54, %v98
    %v135 = vmul.f32 %v55, %v103
    %v136 = vmul.f32 %v56, %v103
    %v137 = vadd.f32 %v105, %v107
    %v138 = vadd.f32 %v137, %v109
    %v139 = vadd.f32 %v138, %v111
    %v140 = vadd.f32 %v139, %v113
    %v141 = vadd.f32 %v140, %v115
    %v142 = vadd.f32 %v141, %v117
    %v143 = vadd.f32 %v142, %v119
    %v144 = vrot.slane %v143, 4
    %v145 = vadd.f32 %v143, %v144
    %v146 = vrot.slane %v145, 2
    %v147 = vadd.f32 %v145, %v146
    %v148 = vrot.slane %v147, 1
    %v149 = vadd.f32 %v147, %v148
    %vm150 = vcmask 556032
    %v151 = vsel %vm150, %v106, 0.0
    %v152 = vsel %vm150, %v108, 0.0
    %v153 = vadd.f32 %v151, %v152
    %v154 = vsel %vm150, %v110, 0.0
    %v155 = vadd.f32 %v153, %v154
    %v156 = vsel %vm150, %v112, 0.0
    %v157 = vadd.f32 %v155, %v156
    %v158 = vsel %vm150, %v114, 0.0
    %v159 = vadd.f32 %v157, %v158
    %v160 = vsel %vm150, %v116, 0.0
    %v161 = vadd.f32 %v159, %v160
    %v162 = vsel %vm150, %v118, 0.0
    %v163 = vadd.f32 %v161, %v162
    %v164 = vsel %vm150, %v120, 0.0
    %v165 = vadd.f32 %v163, %v164
    %v166 = vrot.slane %v165, 4
    %v167 = vadd.f32 %v165, %v166
    %v168 = vrot.slane %v167, 2
    %v169 = vadd.f32 %v167, %v168
    %v170 = vrot.slane %v169, 1
    %v171 = vadd.f32 %v169, %v170
    %v172 = vadd.f32 %v121, %v123
    %v173 = vadd.f32 %v172, %v125
    %v174 = vadd.f32 %v173, %v127
    %v175 = vadd.f32 %v174, %v129
    %v176 = vadd.f32 %v175, %v131
    %v177 = vadd.f32 %v176, %v133
    %v178 = vadd.f32 %v177, %v135
    %v179 = vrot.slane %v178, 4
    %v180 = vadd.f32 %v178, %v179
    %v181 = vrot.slane %v180, 2
    %v182 = vadd.f32 %v180, %v181
    %v183 = vrot.slane %v182, 1
    %v184 = vadd.f32 %v182, %v183
    %v185 = vsel %vm150, %v122, 0.0
    %v186 = vsel %vm150, %v124, 0.0
    %v187 = vadd.f32 %v185, %v186
    %v188 = vsel %vm150, %v126, 0.0
    %v189 = vadd.f32 %v187, %v188
    %v190 = vsel %vm150, %v128, 0.0
    %v191 = vadd.f32 %v189, %v190
    %v192 = vsel %vm150, %v130, 0.0
    %v193 = vadd.f32 %v191, %v192
    %v194 = vsel %vm150, %v132, 0.0
    %v195 = vadd.f32 %v193, %v194
    %v196 = vsel %vm150, %v134, 0.0
    %v197 = vadd.f32 %v195, %v196
    %v198 = vsel %vm150, %v136, 0.0
    %v199 = vadd.f32 %v197, %v198
    %v200 = vrot.slane %v199, 4
    %v201 = vadd.f32 %v199, %v200
    %v202 = vrot.slane %v201, 2
    %v203 = vadd.f32 %v201, %v202
    %v204 = vrot.slane %v203, 1
    %v205 = vadd.f32 %v203, %v204
    %v206 = vadd.f32 %v149, 0.0
    %v207 = vadd.f32 %v171, 0.0
    %v208 = vadd.f32 %v184, 0.0
    %v209 = vadd.f32 %v205, 0.0
    %v210 = vld [vmem:[%s0 + $0x80] sm:$0xff]
    %v211 = vld [vmem:[%s0 + $0x88] sm:$0xff]
    %v212 = vld [vmem:[%s0 + $0x90] sm:$0xff]
    %v213 = vld [vmem:[%s0 + $0x98] sm:$0xff]
    %v214 = vld [vmem:[%s0 + $0xa0] sm:$0xff]
    %v215 = vld [vmem:[%s0 + $0xa8] sm:$0xff]
    %v216 = vld [vmem:[%s0 + $0xb0] sm:$0xff]
    %v217 = vld [vmem:[%s0 + $0xb8] sm:$0xff]
    %v218 = vld [vmem:[%s0 + $0xc0] sm:$0xff]
    %v219 = vld [vmem:[%s0 + $0xc8] sm:$0xff]
    %v220 = vld [vmem:[%s0 + $0xd0] sm:$0xff]
    %v221 = vld [vmem:[%s0 + $0xd8] sm:$0xff]
    %v222 = vld [vmem:[%s0 + $0xe0] sm:$0xff]
    %v223 = vld [vmem:[%s0 + $0xe8] sm:$0xff]
    %v224 = vld [vmem:[%s0 + $0xf0] sm:$0xff]
    %v225 = vld [vmem:[%s0 + $0xf8] sm:$0xff]
    %v226 = vld [vmem:[%s0 + $0x380] sm:$0xff]
    %v227 = vld [vmem:[%s0 + $0x388] sm:$0xff]
    %v228 = vld [vmem:[%s0 + $0x390] sm:$0xff]
    %v229 = vld [vmem:[%s0 + $0x398] sm:$0xff]
    %v230 = vld [vmem:[%s0 + $0x3a0] sm:$0xff]
    %v231 = vld [vmem:[%s0 + $0x3a8] sm:$0xff]
    %v232 = vld [vmem:[%s0 + $0x3b0] sm:$0xff]
    %v233 = vld [vmem:[%s0 + $0x3b8] sm:$0xff]
    %v234 = vld [vmem:[%s0 + $0x3c0] sm:$0xff]
    %v235 = vld [vmem:[%s0 + $0x3c8] sm:$0xff]
    %v236 = vld [vmem:[%s0 + $0x3d0] sm:$0xff]
    %v237 = vld [vmem:[%s0 + $0x3d8] sm:$0xff]
    %v238 = vld [vmem:[%s0 + $0x3e0] sm:$0xff]
    %v239 = vld [vmem:[%s0 + $0x3e8] sm:$0xff]
    %v240 = vld [vmem:[%s0 + $0x3f0] sm:$0xff]
    %v241 = vld [vmem:[%s0 + $0x3f8] sm:$0xff]
    %v242 = vld [vmem:[%s1 + $0x40] sm:$0xff]
    %v243 = vld [vmem:[%s1 + $0x48] sm:$0xff]
    %v244 = vld [vmem:[%s1 + $0x50] sm:$0xff]
    %v245 = vld [vmem:[%s1 + $0x58] sm:$0xff]
    %v246 = vld [vmem:[%s1 + $0x60] sm:$0xff]
    %v247 = vld [vmem:[%s1 + $0x68] sm:$0xff]
    %v248 = vld [vmem:[%s1 + $0x70] sm:$0xff]
    %v249 = vld [vmem:[%s1 + $0x78] sm:$0xff]
    %251 = vset.pattern.permute.xlu0 0
    %252 = vperm.xlu0 %251, %v242
    %v253 = vpop.permute.xlu0 %252
    %256 = vset.pattern.permute.xlu0 0
    %257 = vperm.xlu0 %256, %v243
    %v258 = vpop.permute.xlu0 %257
    %261 = vset.pattern.permute.xlu0 0
    %262 = vperm.xlu0 %261, %v244
    %v263 = vpop.permute.xlu0 %262
    %266 = vset.pattern.permute.xlu0 0
    %267 = vperm.xlu0 %266, %v245
    %v268 = vpop.permute.xlu0 %267
    %271 = vset.pattern.permute.xlu0 0
    %272 = vperm.xlu0 %271, %v246
    %v273 = vpop.permute.xlu0 %272
    %276 = vset.pattern.permute.xlu0 0
    %277 = vperm.xlu0 %276, %v247
    %v278 = vpop.permute.xlu0 %277
    %281 = vset.pattern.permute.xlu0 0
    %282 = vperm.xlu0 %281, %v248
    %v283 = vpop.permute.xlu0 %282
    %286 = vset.pattern.permute.xlu0 0
    %287 = vperm.xlu0 %286, %v249
    %v288 = vpop.permute.xlu0 %287
    %v290 = vmul.f32 %v210, %v253
    %v291 = vmul.f32 %v211, %v253
    %v292 = vmul.f32 %v212, %v258
    %v293 = vmul.f32 %v213, %v258
    %v294 = vmul.f32 %v214, %v263
    %v295 = vmul.f32 %v215, %v263
    %v296 = vmul.f32 %v216, %v268
    %v297 = vmul.f32 %v217, %v268
    %v298 = vmul.f32 %v218, %v273
    %v299 = vmul.f32 %v219, %v273
    %v300 = vmul.f32 %v220, %v278
    %v301 = vmul.f32 %v221, %v278
    %v302 = vmul.f32 %v222, %v283
    %v303 = vmul.f32 %v223, %v283
    %v304 = vmul.f32 %v224, %v288
    %v305 = vmul.f32 %v225, %v288
    %v306 = vmul.f32 %v226, %v253
    %v307 = vmul.f32 %v227, %v253
    %v308 = vmul.f32 %v228, %v258
    %v309 = vmul.f32 %v229, %v258
    %v310 = vmul.f32 %v230, %v263
    %v311 = vmul.f32 %v231, %v263
    %v312 = vmul.f32 %v232, %v268
    %v313 = vmul.f32 %v233, %v268
    %v314 = vmul.f32 %v234, %v273
    %v315 = vmul.f32 %v235, %v273
    %v316 = vmul.f32 %v236, %v278
    %v317 = vmul.f32 %v237, %v278
    %v318 = vmul.f32 %v238, %v283
    %v319 = vmul.f32 %v239, %v283
    %v320 = vmul.f32 %v240, %v288
    %v321 = vmul.f32 %v241, %v288
    %v322 = vadd.f32 %v290, %v292
    %v323 = vadd.f32 %v322, %v294
    %v324 = vadd.f32 %v323, %v296
    %v325 = vadd.f32 %v324, %v298
    %v326 = vadd.f32 %v325, %v300
    %v327 = vadd.f32 %v326, %v302
    %v328 = vadd.f32 %v327, %v304
    %v329 = vrot.slane %v328, 4
    %v330 = vadd.f32 %v328, %v329
    %v331 = vrot.slane %v330, 2
    %v332 = vadd.f32 %v330, %v331
    %v333 = vrot.slane %v332, 1
    %v334 = vadd.f32 %v332, %v333
    %v335 = vsel %vm150, %v291, 0.0
    %v336 = vsel %vm150, %v293, 0.0
    %v337 = vadd.f32 %v335, %v336
    %v338 = vsel %vm150, %v295, 0.0
    %v339 = vadd.f32 %v337, %v338
    %v340 = vsel %vm150, %v297, 0.0
    %v341 = vadd.f32 %v339, %v340
    %v342 = vsel %vm150, %v299, 0.0
    %v343 = vadd.f32 %v341, %v342
    %v344 = vsel %vm150, %v301, 0.0
    %v345 = vadd.f32 %v343, %v344
    %v346 = vsel %vm150, %v303, 0.0
    %v347 = vadd.f32 %v345, %v346
    %v348 = vsel %vm150, %v305, 0.0
    %v349 = vadd.f32 %v347, %v348
    %v350 = vrot.slane %v349, 4
    %v351 = vadd.f32 %v349, %v350
    %v352 = vrot.slane %v351, 2
    %v353 = vadd.f32 %v351, %v352
    %v354 = vrot.slane %v353, 1
    %v355 = vadd.f32 %v353, %v354
    %v356 = vadd.f32 %v306, %v308
    %v357 = vadd.f32 %v356, %v310
    %v358 = vadd.f32 %v357, %v312
    %v359 = vadd.f32 %v358, %v314
    %v360 = vadd.f32 %v359, %v316
    %v361 = vadd.f32 %v360, %v318
    %v362 = vadd.f32 %v361, %v320
    %v363 = vrot.slane %v362, 4
    %v364 = vadd.f32 %v362, %v363
    %v365 = vrot.slane %v364, 2
    %v366 = vadd.f32 %v364, %v365
    %v367 = vrot.slane %v366, 1
    %v368 = vadd.f32 %v366, %v367
    %v369 = vsel %vm150, %v307, 0.0
    %v370 = vsel %vm150, %v309, 0.0
    %v371 = vadd.f32 %v369, %v370
    %v372 = vsel %vm150, %v311, 0.0
    %v373 = vadd.f32 %v371, %v372
    %v374 = vsel %vm150, %v313, 0.0
    %v375 = vadd.f32 %v373, %v374
    %v376 = vsel %vm150, %v315, 0.0
    %v377 = vadd.f32 %v375, %v376
    %v378 = vsel %vm150, %v317, 0.0
    %v379 = vadd.f32 %v377, %v378
    %v380 = vsel %vm150, %v319, 0.0
    %v381 = vadd.f32 %v379, %v380
    %v382 = vsel %vm150, %v321, 0.0
    %v383 = vadd.f32 %v381, %v382
    %v384 = vrot.slane %v383, 4
    %v385 = vadd.f32 %v383, %v384
    %v386 = vrot.slane %v385, 2
    %v387 = vadd.f32 %v385, %v386
    %v388 = vrot.slane %v387, 1
    %v389 = vadd.f32 %v387, %v388
    %v390 = vadd.f32 %v206, %v334
    %v391 = vadd.f32 %v207, %v355
    %v392 = vadd.f32 %v208, %v368
    %v393 = vadd.f32 %v209, %v389
    %v394 = vld [vmem:[%s0 + $0x100] sm:$0xff]
    %v395 = vld [vmem:[%s0 + $0x108] sm:$0xff]
    %v396 = vld [vmem:[%s0 + $0x110] sm:$0xff]
    %v397 = vld [vmem:[%s0 + $0x118] sm:$0xff]
    %v398 = vld [vmem:[%s0 + $0x120] sm:$0xff]
    %v399 = vld [vmem:[%s0 + $0x128] sm:$0xff]
    %v400 = vld [vmem:[%s0 + $0x130] sm:$0xff]
    %v401 = vld [vmem:[%s0 + $0x138] sm:$0xff]
    %v402 = vld [vmem:[%s0 + $0x140] sm:$0xff]
    %v403 = vld [vmem:[%s0 + $0x148] sm:$0xff]
    %v404 = vld [vmem:[%s0 + $0x150] sm:$0xff]
    %v405 = vld [vmem:[%s0 + $0x158] sm:$0xff]
    %v406 = vld [vmem:[%s0 + $0x160] sm:$0xff]
    %v407 = vld [vmem:[%s0 + $0x168] sm:$0xff]
    %v408 = vld [vmem:[%s0 + $0x170] sm:$0xff]
    %v409 = vld [vmem:[%s0 + $0x178] sm:$0xff]
    %v410 = vld [vmem:[%s0 + $0x400] sm:$0xff]
    %v411 = vld [vmem:[%s0 + $0x408] sm:$0xff]
    %v412 = vld [vmem:[%s0 + $0x410] sm:$0xff]
    %v413 = vld [vmem:[%s0 + $0x418] sm:$0xff]
    %v414 = vld [vmem:[%s0 + $0x420] sm:$0xff]
    %v415 = vld [vmem:[%s0 + $0x428] sm:$0xff]
    %v416 = vld [vmem:[%s0 + $0x430] sm:$0xff]
    %v417 = vld [vmem:[%s0 + $0x438] sm:$0xff]
    %v418 = vld [vmem:[%s0 + $0x440] sm:$0xff]
    %v419 = vld [vmem:[%s0 + $0x448] sm:$0xff]
    %v420 = vld [vmem:[%s0 + $0x450] sm:$0xff]
    %v421 = vld [vmem:[%s0 + $0x458] sm:$0xff]
    %v422 = vld [vmem:[%s0 + $0x460] sm:$0xff]
    %v423 = vld [vmem:[%s0 + $0x468] sm:$0xff]
    %v424 = vld [vmem:[%s0 + $0x470] sm:$0xff]
    %v425 = vld [vmem:[%s0 + $0x478] sm:$0xff]
    %v426 = vld [vmem:[%s1 + $0x80] sm:$0xff]
    %v427 = vld [vmem:[%s1 + $0x88] sm:$0xff]
    %v428 = vld [vmem:[%s1 + $0x90] sm:$0xff]
    %v429 = vld [vmem:[%s1 + $0x98] sm:$0xff]
    %v430 = vld [vmem:[%s1 + $0xa0] sm:$0xff]
    %v431 = vld [vmem:[%s1 + $0xa8] sm:$0xff]
    %v432 = vld [vmem:[%s1 + $0xb0] sm:$0xff]
    %v433 = vld [vmem:[%s1 + $0xb8] sm:$0xff]
    %435 = vset.pattern.permute.xlu0 0
    %436 = vperm.xlu0 %435, %v426
    %v437 = vpop.permute.xlu0 %436
    %440 = vset.pattern.permute.xlu0 0
    %441 = vperm.xlu0 %440, %v427
    %v442 = vpop.permute.xlu0 %441
    %445 = vset.pattern.permute.xlu0 0
    %446 = vperm.xlu0 %445, %v428
    %v447 = vpop.permute.xlu0 %446
    %450 = vset.pattern.permute.xlu0 0
    %451 = vperm.xlu0 %450, %v429
    %v452 = vpop.permute.xlu0 %451
    %455 = vset.pattern.permute.xlu0 0
    %456 = vperm.xlu0 %455, %v430
    %v457 = vpop.permute.xlu0 %456
    %460 = vset.pattern.permute.xlu0 0
    %461 = vperm.xlu0 %460, %v431
    %v462 = vpop.permute.xlu0 %461
    %465 = vset.pattern.permute.xlu0 0
    %466 = vperm.xlu0 %465, %v432
    %v467 = vpop.permute.xlu0 %466
    %470 = vset.pattern.permute.xlu0 0
    %471 = vperm.xlu0 %470, %v433
    %v472 = vpop.permute.xlu0 %471
    %v474 = vmul.f32 %v394, %v437
    %v475 = vmul.f32 %v395, %v437
    %v476 = vmul.f32 %v396, %v442
    %v477 = vmul.f32 %v397, %v442
    %v478 = vmul.f32 %v398, %v447
    %v479 = vmul.f32 %v399, %v447
    %v480 = vmul.f32 %v400, %v452
    %v481 = vmul.f32 %v401, %v452
    %v482 = vmul.f32 %v402, %v457
    %v483 = vmul.f32 %v403, %v457
    %v484 = vmul.f32 %v404, %v462
    %v485 = vmul.f32 %v405, %v462
    %v486 = vmul.f32 %v406, %v467
    %v487 = vmul.f32 %v407, %v467
    %v488 = vmul.f32 %v408, %v472
    %v489 = vmul.f32 %v409, %v472
    %v490 = vmul.f32 %v410, %v437
    %v491 = vmul.f32 %v411, %v437
    %v492 = vmul.f32 %v412, %v442
    %v493 = vmul.f32 %v413, %v442
    %v494 = vmul.f32 %v414, %v447
    %v495 = vmul.f32 %v415, %v447
    %v496 = vmul.f32 %v416, %v452
    %v497 = vmul.f32 %v417, %v452
    %v498 = vmul.f32 %v418, %v457
    %v499 = vmul.f32 %v419, %v457
    %v500 = vmul.f32 %v420, %v462
    %v501 = vmul.f32 %v421, %v462
    %v502 = vmul.f32 %v422, %v467
    %v503 = vmul.f32 %v423, %v467
    %v504 = vmul.f32 %v424, %v472
    %v505 = vmul.f32 %v425, %v472
    %v506 = vadd.f32 %v474, %v476
    %v507 = vadd.f32 %v506, %v478
    %v508 = vadd.f32 %v507, %v480
    %v509 = vadd.f32 %v508, %v482
    %v510 = vadd.f32 %v509, %v484
    %v511 = vadd.f32 %v510, %v486
    %v512 = vadd.f32 %v511, %v488
    %v513 = vrot.slane %v512, 4
    %v514 = vadd.f32 %v512, %v513
    %v515 = vrot.slane %v514, 2
    %v516 = vadd.f32 %v514, %v515
    %v517 = vrot.slane %v516, 1
    %v518 = vadd.f32 %v516, %v517
    %v519 = vsel %vm150, %v475, 0.0
    %v520 = vsel %vm150, %v477, 0.0
    %v521 = vadd.f32 %v519, %v520
    %v522 = vsel %vm150, %v479, 0.0
    %v523 = vadd.f32 %v521, %v522
    %v524 = vsel %vm150, %v481, 0.0
    %v525 = vadd.f32 %v523, %v524
    %v526 = vsel %vm150, %v483, 0.0
    %v527 = vadd.f32 %v525, %v526
    %v528 = vsel %vm150, %v485, 0.0
    %v529 = vadd.f32 %v527, %v528
    %v530 = vsel %vm150, %v487, 0.0
    %v531 = vadd.f32 %v529, %v530
    %v532 = vsel %vm150, %v489, 0.0
    %v533 = vadd.f32 %v531, %v532
    %v534 = vrot.slane %v533, 4
    %v535 = vadd.f32 %v533, %v534
    %v536 = vrot.slane %v535, 2
    %v537 = vadd.f32 %v535, %v536
    %v538 = vrot.slane %v537, 1
    %v539 = vadd.f32 %v537, %v538
    %v540 = vadd.f32 %v490, %v492
    %v541 = vadd.f32 %v540, %v494
    %v542 = vadd.f32 %v541, %v496
    %v543 = vadd.f32 %v542, %v498
    %v544 = vadd.f32 %v543, %v500
    %v545 = vadd.f32 %v544, %v502
    %v546 = vadd.f32 %v545, %v504
    %v547 = vrot.slane %v546, 4
    %v548 = vadd.f32 %v546, %v547
    %v549 = vrot.slane %v548, 2
    %v550 = vadd.f32 %v548, %v549
    %v551 = vrot.slane %v550, 1
    %v552 = vadd.f32 %v550, %v551
    %v553 = vsel %vm150, %v491, 0.0
    %v554 = vsel %vm150, %v493, 0.0
    %v555 = vadd.f32 %v553, %v554
    %v556 = vsel %vm150, %v495, 0.0
    %v557 = vadd.f32 %v555, %v556
    %v558 = vsel %vm150, %v497, 0.0
    %v559 = vadd.f32 %v557, %v558
    %v560 = vsel %vm150, %v499, 0.0
    %v561 = vadd.f32 %v559, %v560
    %v562 = vsel %vm150, %v501, 0.0
    %v563 = vadd.f32 %v561, %v562
    %v564 = vsel %vm150, %v503, 0.0
    %v565 = vadd.f32 %v563, %v564
    %v566 = vsel %vm150, %v505, 0.0
    %v567 = vadd.f32 %v565, %v566
    %v568 = vrot.slane %v567, 4
    %v569 = vadd.f32 %v567, %v568
    %v570 = vrot.slane %v569, 2
    %v571 = vadd.f32 %v569, %v570
    %v572 = vrot.slane %v571, 1
    %v573 = vadd.f32 %v571, %v572
    %v574 = vadd.f32 %v390, %v518
    %v575 = vadd.f32 %v391, %v539
    %v576 = vadd.f32 %v392, %v552
    %v577 = vadd.f32 %v393, %v573
    %v578 = vld [vmem:[%s0 + $0x180] sm:$0xff]
    %v579 = vld [vmem:[%s0 + $0x188] sm:$0xff]
    %v580 = vld [vmem:[%s0 + $0x190] sm:$0xff]
    %v581 = vld [vmem:[%s0 + $0x198] sm:$0xff]
    %v582 = vld [vmem:[%s0 + $0x1a0] sm:$0xff]
    %v583 = vld [vmem:[%s0 + $0x1a8] sm:$0xff]
    %v584 = vld [vmem:[%s0 + $0x1b0] sm:$0xff]
    %v585 = vld [vmem:[%s0 + $0x1b8] sm:$0xff]
    %v586 = vld [vmem:[%s0 + $0x1c0] sm:$0xff]
    %v587 = vld [vmem:[%s0 + $0x1c8] sm:$0xff]
    %v588 = vld [vmem:[%s0 + $0x1d0] sm:$0xff]
    %v589 = vld [vmem:[%s0 + $0x1d8] sm:$0xff]
    %v590 = vld [vmem:[%s0 + $0x1e0] sm:$0xff]
    %v591 = vld [vmem:[%s0 + $0x1e8] sm:$0xff]
    %v592 = vld [vmem:[%s0 + $0x1f0] sm:$0xff]
    %v593 = vld [vmem:[%s0 + $0x1f8] sm:$0xff]
    %v594 = vld [vmem:[%s0 + $0x480] sm:$0xff]
    %v595 = vld [vmem:[%s0 + $0x488] sm:$0xff]
    %v596 = vld [vmem:[%s0 + $0x490] sm:$0xff]
    %v597 = vld [vmem:[%s0 + $0x498] sm:$0xff]
    %v598 = vld [vmem:[%s0 + $0x4a0] sm:$0xff]
    %v599 = vld [vmem:[%s0 + $0x4a8] sm:$0xff]
    %v600 = vld [vmem:[%s0 + $0x4b0] sm:$0xff]
    %v601 = vld [vmem:[%s0 + $0x4b8] sm:$0xff]
    %v602 = vld [vmem:[%s0 + $0x4c0] sm:$0xff]
    %v603 = vld [vmem:[%s0 + $0x4c8] sm:$0xff]
    %v604 = vld [vmem:[%s0 + $0x4d0] sm:$0xff]
    %v605 = vld [vmem:[%s0 + $0x4d8] sm:$0xff]
    %v606 = vld [vmem:[%s0 + $0x4e0] sm:$0xff]
    %v607 = vld [vmem:[%s0 + $0x4e8] sm:$0xff]
    %v608 = vld [vmem:[%s0 + $0x4f0] sm:$0xff]
    %v609 = vld [vmem:[%s0 + $0x4f8] sm:$0xff]
    %v610 = vld [vmem:[%s1 + $0xc0] sm:$0xff]
    %v611 = vld [vmem:[%s1 + $0xc8] sm:$0xff]
    %v612 = vld [vmem:[%s1 + $0xd0] sm:$0xff]
    %v613 = vld [vmem:[%s1 + $0xd8] sm:$0xff]
    %v614 = vld [vmem:[%s1 + $0xe0] sm:$0xff]
    %v615 = vld [vmem:[%s1 + $0xe8] sm:$0xff]
    %v616 = vld [vmem:[%s1 + $0xf0] sm:$0xff]
    %v617 = vld [vmem:[%s1 + $0xf8] sm:$0xff]
    %619 = vset.pattern.permute.xlu0 0
    %620 = vperm.xlu0 %619, %v610
    %v621 = vpop.permute.xlu0 %620
    %624 = vset.pattern.permute.xlu0 0
    %625 = vperm.xlu0 %624, %v611
    %v626 = vpop.permute.xlu0 %625
    %629 = vset.pattern.permute.xlu0 0
    %630 = vperm.xlu0 %629, %v612
    %v631 = vpop.permute.xlu0 %630
    %634 = vset.pattern.permute.xlu0 0
    %635 = vperm.xlu0 %634, %v613
    %v636 = vpop.permute.xlu0 %635
    %639 = vset.pattern.permute.xlu0 0
    %640 = vperm.xlu0 %639, %v614
    %v641 = vpop.permute.xlu0 %640
    %644 = vset.pattern.permute.xlu0 0
    %645 = vperm.xlu0 %644, %v615
    %v646 = vpop.permute.xlu0 %645
    %649 = vset.pattern.permute.xlu0 0
    %650 = vperm.xlu0 %649, %v616
    %v651 = vpop.permute.xlu0 %650
    %654 = vset.pattern.permute.xlu0 0
    %655 = vperm.xlu0 %654, %v617
    %v656 = vpop.permute.xlu0 %655
    %v658 = vmul.f32 %v578, %v621
    %v659 = vmul.f32 %v579, %v621
    %v660 = vmul.f32 %v580, %v626
    %v661 = vmul.f32 %v581, %v626
    %v662 = vmul.f32 %v582, %v631
    %v663 = vmul.f32 %v583, %v631
    %v664 = vmul.f32 %v584, %v636
    %v665 = vmul.f32 %v585, %v636
    %v666 = vmul.f32 %v586, %v641
    %v667 = vmul.f32 %v587, %v641
    %v668 = vmul.f32 %v588, %v646
    %v669 = vmul.f32 %v589, %v646
    %v670 = vmul.f32 %v590, %v651
    %v671 = vmul.f32 %v591, %v651
    %v672 = vmul.f32 %v592, %v656
    %v673 = vmul.f32 %v593, %v656
    %v674 = vmul.f32 %v594, %v621
    %v675 = vmul.f32 %v595, %v621
    %v676 = vmul.f32 %v596, %v626
    %v677 = vmul.f32 %v597, %v626
    %v678 = vmul.f32 %v598, %v631
    %v679 = vmul.f32 %v599, %v631
    %v680 = vmul.f32 %v600, %v636
    %v681 = vmul.f32 %v601, %v636
    %v682 = vmul.f32 %v602, %v641
    %v683 = vmul.f32 %v603, %v641
    %v684 = vmul.f32 %v604, %v646
    %v685 = vmul.f32 %v605, %v646
    %v686 = vmul.f32 %v606, %v651
    %v687 = vmul.f32 %v607, %v651
    %v688 = vmul.f32 %v608, %v656
    %v689 = vmul.f32 %v609, %v656
    %v690 = vadd.f32 %v658, %v660
    %v691 = vadd.f32 %v690, %v662
    %v692 = vadd.f32 %v691, %v664
    %v693 = vadd.f32 %v692, %v666
    %v694 = vadd.f32 %v693, %v668
    %v695 = vadd.f32 %v694, %v670
    %v696 = vadd.f32 %v695, %v672
    %v697 = vrot.slane %v696, 4
    %v698 = vadd.f32 %v696, %v697
    %v699 = vrot.slane %v698, 2
    %v700 = vadd.f32 %v698, %v699
    %v701 = vrot.slane %v700, 1
    %v702 = vadd.f32 %v700, %v701
    %v703 = vsel %vm150, %v659, 0.0
    %v704 = vsel %vm150, %v661, 0.0
    %v705 = vadd.f32 %v703, %v704
    %v706 = vsel %vm150, %v663, 0.0
    %v707 = vadd.f32 %v705, %v706
    %v708 = vsel %vm150, %v665, 0.0
    %v709 = vadd.f32 %v707, %v708
    %v710 = vsel %vm150, %v667, 0.0
    %v711 = vadd.f32 %v709, %v710
    %v712 = vsel %vm150, %v669, 0.0
    %v713 = vadd.f32 %v711, %v712
    %v714 = vsel %vm150, %v671, 0.0
    %v715 = vadd.f32 %v713, %v714
    %v716 = vsel %vm150, %v673, 0.0
    %v717 = vadd.f32 %v715, %v716
    %v718 = vrot.slane %v717, 4
    %v719 = vadd.f32 %v717, %v718
    %v720 = vrot.slane %v719, 2
    %v721 = vadd.f32 %v719, %v720
    %v722 = vrot.slane %v721, 1
    %v723 = vadd.f32 %v721, %v722
    %v724 = vadd.f32 %v674, %v676
    %v725 = vadd.f32 %v724, %v678
    %v726 = vadd.f32 %v725, %v680
    %v727 = vadd.f32 %v726, %v682
    %v728 = vadd.f32 %v727, %v684
    %v729 = vadd.f32 %v728, %v686
    %v730 = vadd.f32 %v729, %v688
    %v731 = vrot.slane %v730, 4
    %v732 = vadd.f32 %v730, %v731
    %v733 = vrot.slane %v732, 2
    %v734 = vadd.f32 %v732, %v733
    %v735 = vrot.slane %v734, 1
    %v736 = vadd.f32 %v734, %v735
    %v737 = vsel %vm150, %v675, 0.0
    %v738 = vsel %vm150, %v677, 0.0
    %v739 = vadd.f32 %v737, %v738
    %v740 = vsel %vm150, %v679, 0.0
    %v741 = vadd.f32 %v739, %v740
    %v742 = vsel %vm150, %v681, 0.0
    %v743 = vadd.f32 %v741, %v742
    %v744 = vsel %vm150, %v683, 0.0
    %v745 = vadd.f32 %v743, %v744
    %v746 = vsel %vm150, %v685, 0.0
    %v747 = vadd.f32 %v745, %v746
    %v748 = vsel %vm150, %v687, 0.0
    %v749 = vadd.f32 %v747, %v748
    %v750 = vsel %vm150, %v689, 0.0
    %v751 = vadd.f32 %v749, %v750
    %v752 = vrot.slane %v751, 4
    %v753 = vadd.f32 %v751, %v752
    %v754 = vrot.slane %v753, 2
    %v755 = vadd.f32 %v753, %v754
    %v756 = vrot.slane %v755, 1
    %v757 = vadd.f32 %v755, %v756
    %v758 = vadd.f32 %v574, %v702
    %v759 = vadd.f32 %v575, %v723
    %v760 = vadd.f32 %v576, %v736
    %v761 = vadd.f32 %v577, %v757
    %v762 = vld [vmem:[%s0 + $0x200] sm:$0xff]
    %v763 = vld [vmem:[%s0 + $0x208] sm:$0xff]
    %v764 = vld [vmem:[%s0 + $0x210] sm:$0xff]
    %v765 = vld [vmem:[%s0 + $0x218] sm:$0xff]
    %v766 = vld [vmem:[%s0 + $0x220] sm:$0xff]
    %v767 = vld [vmem:[%s0 + $0x228] sm:$0xff]
    %v768 = vld [vmem:[%s0 + $0x230] sm:$0xff]
    %v769 = vld [vmem:[%s0 + $0x238] sm:$0xff]
    %v770 = vld [vmem:[%s0 + $0x240] sm:$0xff]
    %v771 = vld [vmem:[%s0 + $0x248] sm:$0xff]
    %v772 = vld [vmem:[%s0 + $0x250] sm:$0xff]
    %v773 = vld [vmem:[%s0 + $0x258] sm:$0xff]
    %v774 = vld [vmem:[%s0 + $0x260] sm:$0xff]
    %v775 = vld [vmem:[%s0 + $0x268] sm:$0xff]
    %v776 = vld [vmem:[%s0 + $0x270] sm:$0xff]
    %v777 = vld [vmem:[%s0 + $0x278] sm:$0xff]
    %v778 = vld [vmem:[%s0 + $0x500] sm:$0xff]
    %v779 = vld [vmem:[%s0 + $0x508] sm:$0xff]
    %v780 = vld [vmem:[%s0 + $0x510] sm:$0xff]
    %v781 = vld [vmem:[%s0 + $0x518] sm:$0xff]
    %v782 = vld [vmem:[%s0 + $0x520] sm:$0xff]
    %v783 = vld [vmem:[%s0 + $0x528] sm:$0xff]
    %v784 = vld [vmem:[%s0 + $0x530] sm:$0xff]
    %v785 = vld [vmem:[%s0 + $0x538] sm:$0xff]
    %v786 = vld [vmem:[%s0 + $0x540] sm:$0xff]
    %v787 = vld [vmem:[%s0 + $0x548] sm:$0xff]
    %v788 = vld [vmem:[%s0 + $0x550] sm:$0xff]
    %v789 = vld [vmem:[%s0 + $0x558] sm:$0xff]
    %v790 = vld [vmem:[%s0 + $0x560] sm:$0xff]
    %v791 = vld [vmem:[%s0 + $0x568] sm:$0xff]
    %v792 = vld [vmem:[%s0 + $0x570] sm:$0xff]
    %v793 = vld [vmem:[%s0 + $0x578] sm:$0xff]
    %v794 = vld [vmem:[%s1 + $0x100] sm:$0xff]
    %v795 = vld [vmem:[%s1 + $0x108] sm:$0xff]
    %v796 = vld [vmem:[%s1 + $0x110] sm:$0xff]
    %v797 = vld [vmem:[%s1 + $0x118] sm:$0xff]
    %v798 = vld [vmem:[%s1 + $0x120] sm:$0xff]
    %v799 = vld [vmem:[%s1 + $0x128] sm:$0xff]
    %v800 = vld [vmem:[%s1 + $0x130] sm:$0xff]
    %v801 = vld [vmem:[%s1 + $0x138] sm:$0xff]
    %803 = vset.pattern.permute.xlu0 0
    %804 = vperm.xlu0 %803, %v794
    %v805 = vpop.permute.xlu0 %804
    %808 = vset.pattern.permute.xlu0 0
    %809 = vperm.xlu0 %808, %v795
    %v810 = vpop.permute.xlu0 %809
    %813 = vset.pattern.permute.xlu0 0
    %814 = vperm.xlu0 %813, %v796
    %v815 = vpop.permute.xlu0 %814
    %818 = vset.pattern.permute.xlu0 0
    %819 = vperm.xlu0 %818, %v797
    %v820 = vpop.permute.xlu0 %819
    %823 = vset.pattern.permute.xlu0 0
    %824 = vperm.xlu0 %823, %v798
    %v825 = vpop.permute.xlu0 %824
    %828 = vset.pattern.permute.xlu0 0
    %829 = vperm.xlu0 %828, %v799
    %v830 = vpop.permute.xlu0 %829
    %833 = vset.pattern.permute.xlu0 0
    %834 = vperm.xlu0 %833, %v800
    %v835 = vpop.permute.xlu0 %834
    %838 = vset.pattern.permute.xlu0 0
    %839 = vperm.xlu0 %838, %v801
    %v840 = vpop.permute.xlu0 %839
    %v842 = vmul.f32 %v762, %v805
    %v843 = vmul.f32 %v763, %v805
    %v844 = vmul.f32 %v764, %v810
    %v845 = vmul.f32 %v765, %v810
    %v846 = vmul.f32 %v766, %v815
    %v847 = vmul.f32 %v767, %v815
    %v848 = vmul.f32 %v768, %v820
    %v849 = vmul.f32 %v769, %v820
    %v850 = vmul.f32 %v770, %v825
    %v851 = vmul.f32 %v771, %v825
    %v852 = vmul.f32 %v772, %v830
    %v853 = vmul.f32 %v773, %v830
    %v854 = vmul.f32 %v774, %v835
    %v855 = vmul.f32 %v775, %v835
    %v856 = vmul.f32 %v776, %v840
    %v857 = vmul.f32 %v777, %v840
    %v858 = vmul.f32 %v778, %v805
    %v859 = vmul.f32 %v779, %v805
    %v860 = vmul.f32 %v780, %v810
    %v861 = vmul.f32 %v781, %v810
    %v862 = vmul.f32 %v782, %v815
    %v863 = vmul.f32 %v783, %v815
    %v864 = vmul.f32 %v784, %v820
    %v865 = vmul.f32 %v785, %v820
    %v866 = vmul.f32 %v786, %v825
    %v867 = vmul.f32 %v787, %v825
    %v868 = vmul.f32 %v788, %v830
    %v869 = vmul.f32 %v789, %v830
    %v870 = vmul.f32 %v790, %v835
    %v871 = vmul.f32 %v791, %v835
    %v872 = vmul.f32 %v792, %v840
    %v873 = vmul.f32 %v793, %v840
    %v874 = vadd.f32 %v842, %v844
    %v875 = vadd.f32 %v874, %v846
    %v876 = vadd.f32 %v875, %v848
    %v877 = vadd.f32 %v876, %v850
    %v878 = vadd.f32 %v877, %v852
    %v879 = vadd.f32 %v878, %v854
    %v880 = vadd.f32 %v879, %v856
    %v881 = vrot.slane %v880, 4
    %v882 = vadd.f32 %v880, %v881
    %v883 = vrot.slane %v882, 2
    %v884 = vadd.f32 %v882, %v883
    %v885 = vrot.slane %v884, 1
    %v886 = vadd.f32 %v884, %v885
    %v887 = vsel %vm150, %v843, 0.0
    %v888 = vsel %vm150, %v845, 0.0
    %v889 = vadd.f32 %v887, %v888
    %v890 = vsel %vm150, %v847, 0.0
    %v891 = vadd.f32 %v889, %v890
    %v892 = vsel %vm150, %v849, 0.0
    %v893 = vadd.f32 %v891, %v892
    %v894 = vsel %vm150, %v851, 0.0
    %v895 = vadd.f32 %v893, %v894
    %v896 = vsel %vm150, %v853, 0.0
    %v897 = vadd.f32 %v895, %v896
    %v898 = vsel %vm150, %v855, 0.0
    %v899 = vadd.f32 %v897, %v898
    %v900 = vsel %vm150, %v857, 0.0
    %v901 = vadd.f32 %v899, %v900
    %v902 = vrot.slane %v901, 4
    %v903 = vadd.f32 %v901, %v902
    %v904 = vrot.slane %v903, 2
    %v905 = vadd.f32 %v903, %v904
    %v906 = vrot.slane %v905, 1
    %v907 = vadd.f32 %v905, %v906
    %v908 = vadd.f32 %v858, %v860
    %v909 = vadd.f32 %v908, %v862
    %v910 = vadd.f32 %v909, %v864
    %v911 = vadd.f32 %v910, %v866
    %v912 = vadd.f32 %v911, %v868
    %v913 = vadd.f32 %v912, %v870
    %v914 = vadd.f32 %v913, %v872
    %v915 = vrot.slane %v914, 4
    %v916 = vadd.f32 %v914, %v915
    %v917 = vrot.slane %v916, 2
    %v918 = vadd.f32 %v916, %v917
    %v919 = vrot.slane %v918, 1
    %v920 = vadd.f32 %v918, %v919
    %v921 = vsel %vm150, %v859, 0.0
    %v922 = vsel %vm150, %v861, 0.0
    %v923 = vadd.f32 %v921, %v922
    %v924 = vsel %vm150, %v863, 0.0
    %v925 = vadd.f32 %v923, %v924
    %v926 = vsel %vm150, %v865, 0.0
    %v927 = vadd.f32 %v925, %v926
    %v928 = vsel %vm150, %v867, 0.0
    %v929 = vadd.f32 %v927, %v928
    %v930 = vsel %vm150, %v869, 0.0
    %v931 = vadd.f32 %v929, %v930
    %v932 = vsel %vm150, %v871, 0.0
    %v933 = vadd.f32 %v931, %v932
    %v934 = vsel %vm150, %v873, 0.0
    %v935 = vadd.f32 %v933, %v934
    %v936 = vrot.slane %v935, 4
    %v937 = vadd.f32 %v935, %v936
    %v938 = vrot.slane %v937, 2
    %v939 = vadd.f32 %v937, %v938
    %v940 = vrot.slane %v939, 1
    %v941 = vadd.f32 %v939, %v940
    %v942 = vadd.f32 %v758, %v886
    %v943 = vadd.f32 %v759, %v907
    %v944 = vadd.f32 %v760, %v920
    %v945 = vadd.f32 %v761, %v941
    %v946 = vld [vmem:[%s0 + $0x280] sm:$0xff]
    %v947 = vld [vmem:[%s0 + $0x288] sm:$0xff]
    %v948 = vld [vmem:[%s0 + $0x290] sm:$0xff]
    %v949 = vld [vmem:[%s0 + $0x298] sm:$0xff]
    %v950 = vld [vmem:[%s0 + $0x2a0] sm:$0xff]
    %v951 = vld [vmem:[%s0 + $0x2a8] sm:$0xff]
    %v952 = vld [vmem:[%s0 + $0x2b0] sm:$0xff]
    %v953 = vld [vmem:[%s0 + $0x2b8] sm:$0xff]
    %v954 = vld [vmem:[%s0 + $0x2c0] sm:$0xff]
    %v955 = vld [vmem:[%s0 + $0x2c8] sm:$0xff]
    %v956 = vld [vmem:[%s0 + $0x2d0] sm:$0xff]
    %v957 = vld [vmem:[%s0 + $0x2d8] sm:$0xff]
    %v958 = vld [vmem:[%s0 + $0x2e0] sm:$0xff]
    %v959 = vld [vmem:[%s0 + $0x2e8] sm:$0xff]
    %v960 = vld [vmem:[%s0 + $0x2f0] sm:$0xff]
    %v961 = vld [vmem:[%s0 + $0x2f8] sm:$0xff]
    %v962 = vld [vmem:[%s0 + $0x580] sm:$0xff]
    %v963 = vld [vmem:[%s0 + $0x588] sm:$0xff]
    %v964 = vld [vmem:[%s0 + $0x590] sm:$0xff]
    %v965 = vld [vmem:[%s0 + $0x598] sm:$0xff]
    %v966 = vld [vmem:[%s0 + $0x5a0] sm:$0xff]
    %v967 = vld [vmem:[%s0 + $0x5a8] sm:$0xff]
    %v968 = vld [vmem:[%s0 + $0x5b0] sm:$0xff]
    %v969 = vld [vmem:[%s0 + $0x5b8] sm:$0xff]
    %v970 = vld [vmem:[%s0 + $0x5c0] sm:$0xff]
    %v971 = vld [vmem:[%s0 + $0x5c8] sm:$0xff]
    %v972 = vld [vmem:[%s0 + $0x5d0] sm:$0xff]
    %v973 = vld [vmem:[%s0 + $0x5d8] sm:$0xff]
    %v974 = vld [vmem:[%s0 + $0x5e0] sm:$0xff]
    %v975 = vld [vmem:[%s0 + $0x5e8] sm:$0xff]
    %v976 = vld [vmem:[%s0 + $0x5f0] sm:$0xff]
    %v977 = vld [vmem:[%s0 + $0x5f8] sm:$0xff]
    %v978 = vld [vmem:[%s1 + $0x140] sm:$0xff]
    %v979 = vld [vmem:[%s1 + $0x148] sm:$0xff]
    %v980 = vld [vmem:[%s1 + $0x150] sm:$0xff]
    %v981 = vld [vmem:[%s1 + $0x158] sm:$0xff]
    %v982 = vld [vmem:[%s1 + $0x160] sm:$0xff]
    %v983 = vld [vmem:[%s1 + $0x168] sm:$0xff]
    %v984 = vld [vmem:[%s1 + $0x170] sm:$0xff]
    %v985 = vld [vmem:[%s1 + $0x178] sm:$0xff]
    %987 = vset.pattern.permute.xlu0 0
    %988 = vperm.xlu0 %987, %v978
    %v989 = vpop.permute.xlu0 %988
    %992 = vset.pattern.permute.xlu0 0
    %993 = vperm.xlu0 %992, %v979
    %v994 = vpop.permute.xlu0 %993
    %997 = vset.pattern.permute.xlu0 0
    %998 = vperm.xlu0 %997, %v980
    %v999 = vpop.permute.xlu0 %998
    %1002 = vset.pattern.permute.xlu0 0
    %1003 = vperm.xlu0 %1002, %v981
    %v1004 = vpop.permute.xlu0 %1003
    %1007 = vset.pattern.permute.xlu0 0
    %1008 = vperm.xlu0 %1007, %v982
    %v1009 = vpop.permute.xlu0 %1008
    %1012 = vset.pattern.permute.xlu0 0
    %1013 = vperm.xlu0 %1012, %v983
    %v1014 = vpop.permute.xlu0 %1013
    %1017 = vset.pattern.permute.xlu0 0
    %1018 = vperm.xlu0 %1017, %v984
    %v1019 = vpop.permute.xlu0 %1018
    %1022 = vset.pattern.permute.xlu0 0
    %1023 = vperm.xlu0 %1022, %v985
    %v1024 = vpop.permute.xlu0 %1023
    %v1026 = vmul.f32 %v946, %v989
    %v1027 = vmul.f32 %v947, %v989
    %v1028 = vmul.f32 %v948, %v994
    %v1029 = vmul.f32 %v949, %v994
    %v1030 = vmul.f32 %v950, %v999
    %v1031 = vmul.f32 %v951, %v999
    %v1032 = vmul.f32 %v952, %v1004
    %v1033 = vmul.f32 %v953, %v1004
    %v1034 = vmul.f32 %v954, %v1009
    %v1035 = vmul.f32 %v955, %v1009
    %v1036 = vmul.f32 %v956, %v1014
    %v1037 = vmul.f32 %v957, %v1014
    %v1038 = vmul.f32 %v958, %v1019
    %v1039 = vmul.f32 %v959, %v1019
    %v1040 = vmul.f32 %v960, %v1024
    %v1041 = vmul.f32 %v961, %v1024
    %v1042 = vmul.f32 %v962, %v989
    %v1043 = vmul.f32 %v963, %v989
    %v1044 = vmul.f32 %v964, %v994
    %v1045 = vmul.f32 %v965, %v994
    %v1046 = vmul.f32 %v966, %v999
    %v1047 = vmul.f32 %v967, %v999
    %v1048 = vmul.f32 %v968, %v1004
    %v1049 = vmul.f32 %v969, %v1004
    %v1050 = vmul.f32 %v970, %v1009
    %v1051 = vmul.f32 %v971, %v1009
    %v1052 = vmul.f32 %v972, %v1014
    %v1053 = vmul.f32 %v973, %v1014
    %v1054 = vmul.f32 %v974, %v1019
    %v1055 = vmul.f32 %v975, %v1019
    %v1056 = vmul.f32 %v976, %v1024
    %v1057 = vmul.f32 %v977, %v1024
    %v1058 = vadd.f32 %v1026, %v1028
    %v1059 = vadd.f32 %v1058, %v1030
    %v1060 = vadd.f32 %v1059, %v1032
    %v1061 = vadd.f32 %v1060, %v1034
    %v1062 = vadd.f32 %v1061, %v1036
    %v1063 = vadd.f32 %v1062, %v1038
    %v1064 = vadd.f32 %v1063, %v1040
    %v1065 = vrot.slane %v1064, 4
    %v1066 = vadd.f32 %v1064, %v1065
    %v1067 = vrot.slane %v1066, 2
    %v1068 = vadd.f32 %v1066, %v1067
    %v1069 = vrot.slane %v1068, 1
    %v1070 = vadd.f32 %v1068, %v1069
    %v1071 = vsel %vm150, %v1027, 0.0
    %v1072 = vsel %vm150, %v1029, 0.0
    %v1073 = vadd.f32 %v1071, %v1072
    %v1074 = vsel %vm150, %v1031, 0.0
    %v1075 = vadd.f32 %v1073, %v1074
    %v1076 = vsel %vm150, %v1033, 0.0
    %v1077 = vadd.f32 %v1075, %v1076
    %v1078 = vsel %vm150, %v1035, 0.0
    %v1079 = vadd.f32 %v1077, %v1078
    %v1080 = vsel %vm150, %v1037, 0.0
    %v1081 = vadd.f32 %v1079, %v1080
    %v1082 = vsel %vm150, %v1039, 0.0
    %v1083 = vadd.f32 %v1081, %v1082
    %v1084 = vsel %vm150, %v1041, 0.0
    %v1085 = vadd.f32 %v1083, %v1084
    %v1086 = vrot.slane %v1085, 4
    %v1087 = vadd.f32 %v1085, %v1086
    %v1088 = vrot.slane %v1087, 2
    %v1089 = vadd.f32 %v1087, %v1088
    %v1090 = vrot.slane %v1089, 1
    %v1091 = vadd.f32 %v1089, %v1090
    %v1092 = vadd.f32 %v1042, %v1044
    %v1093 = vadd.f32 %v1092, %v1046
    %v1094 = vadd.f32 %v1093, %v1048
    %v1095 = vadd.f32 %v1094, %v1050
    %v1096 = vadd.f32 %v1095, %v1052
    %v1097 = vadd.f32 %v1096, %v1054
    %v1098 = vadd.f32 %v1097, %v1056
    %v1099 = vrot.slane %v1098, 4
    %v1100 = vadd.f32 %v1098, %v1099
    %v1101 = vrot.slane %v1100, 2
    %v1102 = vadd.f32 %v1100, %v1101
    %v1103 = vrot.slane %v1102, 1
    %v1104 = vadd.f32 %v1102, %v1103
    %v1105 = vsel %vm150, %v1043, 0.0
    %v1106 = vsel %vm150, %v1045, 0.0
    %v1107 = vadd.f32 %v1105, %v1106
    %v1108 = vsel %vm150, %v1047, 0.0
    %v1109 = vadd.f32 %v1107, %v1108
    %v1110 = vsel %vm150, %v1049, 0.0
    %v1111 = vadd.f32 %v1109, %v1110
    %v1112 = vsel %vm150, %v1051, 0.0
    %v1113 = vadd.f32 %v1111, %v1112
    %v1114 = vsel %vm150, %v1053, 0.0
    %v1115 = vadd.f32 %v1113, %v1114
    %v1116 = vsel %vm150, %v1055, 0.0
    %v1117 = vadd.f32 %v1115, %v1116
    %v1118 = vsel %vm150, %v1057, 0.0
    %v1119 = vadd.f32 %v1117, %v1118
    %v1120 = vrot.slane %v1119, 4
    %v1121 = vadd.f32 %v1119, %v1120
    %v1122 = vrot.slane %v1121, 2
    %v1123 = vadd.f32 %v1121, %v1122
    %v1124 = vrot.slane %v1123, 1
    %v1125 = vadd.f32 %v1123, %v1124
    %v1126 = vadd.f32 %v942, %v1070
    %v1127 = vadd.f32 %v943, %v1091
    %v1128 = vadd.f32 %v944, %v1104
    %v1129 = vadd.f32 %v945, %v1125
    %s1130 = sld [smem:[#allocation2]]
    %v1131 = vstv %s1130
    %v1132 = vadd.f32 %v1126, %v1131
    %v1133 = vadd.f32 %v1127, %v1131
    %v1134 = vadd.f32 %v1128, %v1131
    %v1135 = vadd.f32 %v1129, %v1131
    %v1136 = vand.u32 2147483647, %v1132
    %v1137 = vand.u32 2147483647, %v1133
    %v1138 = vand.u32 2147483647, %v1134
    %v1139 = vand.u32 2147483647, %v1135
    %v1140 = vsub.f32 0.0, %v1136
    %v1141 = vsub.f32 0.0, %v1137
    %v1142 = vsub.f32 0.0, %v1138
    %v1143 = vsub.f32 0.0, %v1139
    %v1144 = vmul.f32 %v1140, 1.442695
    %v1145 = vpow.pop %v1144
    %v1146 = vmul.f32 %v1141, 1.442695
    %v1147 = vpow.pop %v1146
    %v1148 = vmul.f32 %v1142, 1.442695
    %v1149 = vpow.pop %v1148
    %v1150 = vmul.f32 %v1143, 1.442695
    %v1151 = vpow.pop %v1150
    %v1152 = vadd.f32 %v1145, 1.0
    %v1153 = vadd.f32 %v1147, 1.0
    %v1154 = vadd.f32 %v1149, 1.0
    %v1155 = vadd.f32 %v1151, 1.0
    %v1156 = vrcp.pop %v1152
    %v1157 = vmul.f32 1.0, %v1156
    %v1158 = vrcp.pop %v1153
    %v1159 = vmul.f32 1.0, %v1158
    %v1160 = vrcp.pop %v1154
    %v1161 = vmul.f32 1.0, %v1160
    %v1162 = vrcp.pop %v1155
    %v1163 = vmul.f32 1.0, %v1162
    %vm1164 = vcmp.ge.f32.partialorder %v1132, 0.0
    %vm1165 = vcmp.ge.f32.partialorder %v1133, 0.0
    %vm1166 = vcmp.ge.f32.partialorder %v1134, 0.0
    %vm1167 = vcmp.ge.f32.partialorder %v1135, 0.0
    %v1168 = vmul.f32 %v1145, %v1157
    %v1169 = vmul.f32 %v1147, %v1159
    %v1170 = vmul.f32 %v1149, %v1161
    %v1171 = vmul.f32 %v1151, %v1163
    %v1172 = vsel %vm1164, %v1157, %v1168
    %v1173 = vsel %vm1165, %v1159, %v1169
    %v1174 = vsel %vm1166, %v1161, %v1170
    %v1175 = vsel %vm1167, %v1163, %v1171
    %v1180 = vcombine.low %v1172, %v1173
    %v1182 = vunpack.c.l.s4 1983009808
    %v1183 = vunpack.c.0.s8 %v1182
    %v1184 = vlaneseq
    %v1185 = vshrl.u32 %v1184, 7
    %v1186 = vsub.s32 %v1183, %v1185
    %v1187 = vrot.slane %v1180, %v1186
    %v1188 = vcombine.low %v1174, %v1175
    %v1190 = vunpack.c.l.s4 1983009808
    %v1191 = vunpack.c.0.s8 %v1190
    %v1192 = vlaneseq
    %v1193 = vshrl.u32 %v1192, 7
    %v1194 = vsub.s32 %v1191, %v1193
    %v1195 = vrot.slane %v1188, %v1194
    %vm1196 = vcmask 1044484
    %v1197 = vsel %vm1196, %v1187, %v1187
    %vm1198 = vcmask 1046534
    %v1199 = vsel %vm1198, %v1187, %v1197
    %v1200 = vrot.slane %v1195, 7
    %vm1201 = vcmask 1041409
    %v1202 = vsel %vm1201, %v1200, %v1199
    %vm1203 = vcmask 1043459
    %v1204 = vsel %vm1203, %v1200, %v1202
    %vm1205 = vcmask 1045509
    %v1206 = vsel %vm1205, %v1200, %v1204
    %vm1207 = vcmask 1047559
    %v1208 = vsel %vm1207, %v1200, %v1206
    %vm1210 = vcmask 1041408
    %vm1211 = vcmask 551938
    %vm1212 = vmor %vm1211, %vm1210
    %1213 = vst.msk [vmem:[#allocation4] sm:$0xf] %vm1212, %v1208
    %v1214 = vld [vmem:[%s3] sm:$0x3]
    %v1216 = vlaneseq
    %v1217 = vshrl.u32 %v1216, 7
    %v1218 = vsub.s32 0, %v1217
    %v1219 = vrot.slane %v1214, %v1218
    %v1220 = vlaneseq
    %v1221 = vshrl.u32 %v1220, 7
    %v1222 = vsub.s32 1, %v1221
    %v1223 = vrot.slane %v1214, %v1222
    %v1226 = vmul.f32 %v1172, %v1219
    %v1227 = vmul.f32 %v1173, %v1223
    %v1228 = vmul.f32 %v1174, %v1219
    %v1229 = vmul.f32 %v1175, %v1223
    %v1234 = vrot.slane %v1228, 7
    %v1235 = vsel %vm1201, %v1234, %v1226
    %v1236 = vrot.slane %v1229, 7
    %v1237 = vsel %vm1201, %v1236, %v1227
    %v1240 = vsel %vm1210, %v1235, 0.0
    %vm1241 = vcmask 549888
    %v1242 = vsel %vm1241, %v1237, 0.0
    %v1243 = vadd.f32 %v1240, %v1242
    %1244 = vadd.xlane.f32.xlu0 %v1243
    %v1245 = vpop.xlane.xlu0 %1244
    %s1246 = sld [smem:[#allocation3]]
    %v1247 = vstv %s1246
    %v1248 = vadd.f32 %v1245, %v1247
    %v1249 = vand.u32 2147483647, %v1248
    %v1250 = vsub.f32 0.0, %v1249
    %v1251 = vmul.f32 %v1250, 1.442695
    %v1252 = vpow.pop %v1251
    %v1253 = vadd.f32 %v1252, 1.0
    %v1254 = vrcp.pop %v1253
    %v1255 = vmul.f32 1.0, %v1254
    %vm1256 = vcmp.ge.f32.partialorder %v1248, 0.0
    %v1257 = vmul.f32 %v1252, %v1255
    %v1258 = vsel %vm1256, %v1255, %v1257
    %vm1259 = vcmask 1024
    %1260 = vst.msk [vmem:[%s6] sm:$0x3] %vm1259, %v1258
    // Predicated region
    $region22: #{tpu_custom_call.1} parent=1 // pred_check
      _
    $region23: #{tpu_custom_call.1} parent=1 // pred_check_branch
      %1262 = sbr.rel (0) target = $region25
    $region24: #{tpu_custom_call.1} parent=1 // pred_region
      %s1264 = ssub.s32 64, 64
      %1265 = vsyncadd [#allocation5], %s1264
      %s1267 = sshll.u32 [#allocation4], 4
      %s1268 = int_to_ptr.vmem [resolvable:$true] %s1267
      %1270 = dma.vmem_to_hbm [thread:$0]  %s1268, 64, %s5, [#allocation5]
    $region25: #{tpu_custom_call.1} parent=1 // pred_fallthru
      _
    // Predicated region
    $region26: #{tpu_custom_call.1} parent=1 // pred_check
      _
    $region27: #{tpu_custom_call.1} parent=1 // pred_check_branch
      %1272 = sbr.rel (0) target = $region29
    $region28: #{tpu_custom_call.1} parent=1 // pred_region
      _
    $region29: #{tpu_custom_call.1} parent=1 // pred_fallthru
      _
    // Predicated region
    $region30: #{tpu_custom_call.1} parent=1 // pred_check
      _
    $region31: #{tpu_custom_call.1} parent=1 // pred_check_branch
      %1274 = sbr.rel (0) target = $region33
    $region32: #{tpu_custom_call.1} parent=1 // pred_region
      %1275 = dma.done [#allocation5], 64
    $region33: #{tpu_custom_call.1} parent=1 // pred_fallthru
      _
    // Predicated region
    $region34: #{tpu_custom_call.1} parent=1 // pred_check
      _
    $region35: #{tpu_custom_call.1} parent=1 // pred_check_branch
      %1277 = sbr.rel (0) target = $region37
    $region36: #{tpu_custom_call.1} parent=1 // pred_region
      _
    $region37: #{tpu_custom_call.1} parent=1 // pred_fallthru
      _
    %1278 = vsyncpa [#allocation5], 1

</llo_original>
